<compile_context>
chip_gen: v7x
topology: tpu7x:2x2x1
jax: 0.10.0
libtpu: 0.0.40
codegen_flags: <defaults>
</compile_context>

<pallas_src>
import math

import jax
import jax.numpy as jnp
from jax.experimental import pallas as pl
from jax.experimental.pallas import tpu as pltpu


def _patch_embed_kernel(xt_ref, w_ref, b_ref, o_ref):
    # xt_ref: (1, K, tile_np) bf16   -- transposed im2col tile (lanes = patches)
    # w_ref : (E, K)          bf16   -- flattened conv weight (single-buffered)
    # b_ref : (E, 1)          f32    -- bias (single-buffered)
    # o_ref : (1, E, tile_np)        -- native (B, E, Np) output layout, lane-dense
    y = jnp.dot(w_ref[...], xt_ref[0],                  # MXU, bf16 in / f32 accum
                preferred_element_type=jnp.float32)     # (E, tile_np)
    y = y + b_ref[...]                                  # f32 bias add on the VPU
    o_ref[0] = y.astype(o_ref.dtype)


def _vmem_footprint(tile_np, K, E, out_bytes):
    """Bytes of VMEM the pipeline needs for one choice of lane tile."""
    return (2 * K * tile_np * 2          # double-buffered bf16 activation block
            + 2 * E * tile_np * out_bytes  # double-buffered output block
            + E * K * 2                  # single-buffered weight (Buffered(1))
            + E * 4)                     # bias


def _select_tile_np(Np, B, K, E, out_bytes, vmem_cap):
    """Largest lane tile (128-multiple divisor of Np) whose footprint fits VMEM."""
    budget = int(vmem_cap * 0.6)         # headroom for internal scratch / sems
    divs = [d for d in range(128, min(Np, 4096) + 1, 128)
            if Np % d == 0 and _vmem_footprint(d, K, E, out_bytes) <= budget]
    if divs:
        # v7x has 2 TensorCores: keep >= 2 parallel patch tiles when B == 1.
        if B == 1:
            multi = [d for d in divs if Np // d >= 2]
            if multi:
                divs = multi
        return max(divs), Np             # no padding, no slicing
    if Np <= 1024 and _vmem_footprint(Np, K, E, out_bytes) <= budget:
        # Full-axis block (legal even when Np % 128 != 0).  Np < 128 means masked
        # vst stores -- correct but a known perf cliff; only hit for tiny images.
        return Np, Np
    # Last resort: pad the patch axis (costs an extra pass over xt / out).
    for tile in (1024, 512, 256, 128):
        if _vmem_footprint(tile, K, E, out_bytes) <= budget:
            return tile, pl.cdiv(Np, tile) * tile
    return 128, pl.cdiv(Np, 128) * 128


def distributed_patch_embed_forward(x, weight, bias, patch_size, *,
                                    compute_dtype=jnp.bfloat16,
                                    out_dtype=None):
    """x: (B, C, H, W); weight: (E, C, P0, P1); bias: (E,).
    Returns (B, E, Hp*Wp), matching self.proj(x).flatten(2)."""
    B, C, H, W = x.shape
    E = weight.shape[0]
    P0, P1 = patch_size
    assert H % P0 == 0 and W % P1 == 0, "image size must be divisible by patch size"
    Hp, Wp = H // P0, W // P1
    Np = Hp * Wp
    K = C * P0 * P1
    out_dtype = x.dtype if out_dtype is None else out_dtype
    out_bytes = jnp.dtype(out_dtype).itemsize

    # Transposed im2col (B, K, Np): xt[b, (c,p0,p1), (hp,wp)] = x[b,c,hp*P0+p0,wp*P1+p1].
    # Row order (c,p0,p1) matches weight.reshape(E,K); column order (hp,wp) matches
    # .flatten(2).  ONE chained expression -> XLA fuses transpose + bf16 cast into a
    # single pass over x.
    xt = (x.reshape(B, C, Hp, P0, Wp, P1)
            .transpose(0, 1, 3, 5, 2, 4)
            .reshape(B, K, Np)
            .astype(compute_dtype))
    w2d = weight.reshape(E, K).astype(compute_dtype)
    b2d = bias.reshape(E, 1).astype(jnp.float32)

    # bf16 packs 16 rows per sublane group: keep the contraction dim 16-aligned.
    # (No-op for the usual 4x4 / 8x8 / 16x16 patches where P0*P1 % 16 == 0.)
    if K % 16 != 0:
        k_pad = (K + 15) // 16 * 16
        xt = jnp.pad(xt, ((0, 0), (0, k_pad - K), (0, 0)))
        w2d = jnp.pad(w2d, ((0, 0), (0, k_pad - K)))
        K = k_pad

    # Generation-aware VMEM budget (v5e/v6e: 128 MiB, v7x: 64 MiB per core).
    try:
        vmem_cap = int(pltpu.get_tpu_info().vmem_capacity_bytes)
    except Exception:
        vmem_cap = 64 << 20                       # conservative default (v7x)

    tile_np, np_pad = _select_tile_np(Np, B, K, E, out_bytes, vmem_cap)
    if np_pad != Np:                              # rare fallback path only
        xt = jnp.pad(xt, ((0, 0), (0, 0), (0, np_pad - Np)))

    grid = (B, np_pad // tile_np)

    vmem_limit = min(int(vmem_cap * 0.9),
                     max(32 << 20,
                         _vmem_footprint(tile_np, K, E, out_bytes) + (16 << 20)))

    cost = pl.CostEstimate(
        flops=2 * B * E * K * np_pad,
        transcendentals=0,
        bytes_accessed=(xt.size * xt.dtype.itemsize
                        + w2d.size * w2d.dtype.itemsize
                        + b2d.size * b2d.dtype.itemsize
                        + B * E * np_pad * out_bytes))

    out = pl.pallas_call(
        _patch_embed_kernel,
        out_shape=jax.ShapeDtypeStruct((B, E, np_pad), out_dtype),
        grid_spec=pltpu.PrefetchScalarGridSpec(
            num_scalar_prefetch=0,
            grid=grid,
            in_specs=[
                pl.BlockSpec((1, K, tile_np), lambda b, j: (b, 0, j)),
                pl.BlockSpec((E, K), lambda b, j: (0, 0),
                             pipeline_mode=pl.Buffered(1)),
                pl.BlockSpec((E, 1), lambda b, j: (0, 0),
                             pipeline_mode=pl.Buffered(1)),
            ],
            out_specs=pl.BlockSpec((1, E, tile_np), lambda b, j: (b, 0, j)),
        ),
        compiler_params=pltpu.CompilerParams(
            dimension_semantics=("parallel", "parallel"),
            vmem_limit_bytes=vmem_limit,
        ),
        cost_estimate=cost,
    )(xt, w2d, b2d)

    if np_pad != Np:                              # rare fallback path only
        out = out[:, :, :Np]
    return out


def reference_forward(x, weight, bias, patch_size):
    """Plain-JAX reference: strided conv (== PyTorch Conv2d) + flatten(2), all f32."""
    y = jax.lax.conv_general_dilated(
        x.astype(jnp.float32), weight.astype(jnp.float32),
        window_strides=patch_size, padding="VALID",
        dimension_numbers=("NCHW", "OIHW", "NCHW"))
    y = y + bias.astype(jnp.float32)[None, :, None, None]
    B, E, Hp, Wp = y.shape
    return y.reshape(B, E, Hp * Wp).astype(x.dtype)


if __name__ == "__main__":
    # Small shapes consistent with the module: batch=2, in_chans=4, 64x64 image,
    # 4x4 patches -> 256 patches (lane-dense, 2x128), embed_dim=32.
    B, C = 2, 4
    img_size = (64, 64)
    patch_size = (4, 4)
    embed_dim = 32

    key = jax.random.PRNGKey(0)
    kx, kw, kb = jax.random.split(key, 3)

    x = jax.random.normal(kx, (B, C, *img_size), jnp.float32)

    # PyTorch nn.Conv2d default init: U(-1/sqrt(fan_in), 1/sqrt(fan_in)).
    fan_in = C * patch_size[0] * patch_size[1]
    bound = 1.0 / math.sqrt(fan_in)
    weight = jax.random.uniform(kw, (embed_dim, C, patch_size[0], patch_size[1]),
                                jnp.float32, -bound, bound)
    bias = jax.random.uniform(kb, (embed_dim,), jnp.float32, -bound, bound)

    fwd = jax.jit(lambda xx, ww, bb: distributed_patch_embed_forward(xx, ww, bb, patch_size))
    y = fwd(x, weight, bias)
    y = jax.block_until_ready(y)

    num_patches = (img_size[0] // patch_size[0]) * (img_size[1] // patch_size[1])
    y_ref = reference_forward(x, weight, bias, patch_size)

    assert y.shape == (B, embed_dim, num_patches)
    max_err = float(jnp.max(jnp.abs(y.astype(jnp.float32) - y_ref.astype(jnp.float32))))
    # bf16 MXU operands vs f32 reference -> small rounding noise; well inside 3e-2.
    assert jnp.allclose(y, y_ref, atol=3e-2, rtol=3e-2), max_err

    print("KERNEL_OK")
</pallas_src>

<mosaic_0001>
module attributes {stable_mosaic.version = 11 : i64} {
  func.func @_patch_embed_kernel(%arg0: i32, %arg1: i32, %arg2: memref<1x64x256xbf16, #tpu.memory_space<vmem>>, %arg3: memref<32x64xbf16, #tpu.memory_space<vmem>>, %arg4: memref<32x1xf32, #tpu.memory_space<vmem>>, %arg5: memref<1x32x256xf32, #tpu.memory_space<vmem>>) attributes {dimension_semantics = [#tpu.dimension_semantics<parallel>, #tpu.dimension_semantics<parallel>], iteration_bounds = array<i64: 2, 1>, scalar_prefetch = 0 : i64, scratch_operands = 0 : i64, tpu.core_type = #tpu.core_type<tc>, window_params = [{transform_indices = @transform_0, window_bounds = array<i64: 1, 64, 256>}, {pipeline_mode = #tpu.pipeline_mode<synchronous>, transform_indices = @transform_1, window_bounds = array<i64: 32, 64>}, {pipeline_mode = #tpu.pipeline_mode<synchronous>, transform_indices = @transform_2, window_bounds = array<i64: 32, 1>}, {transform_indices = @transform_3, window_bounds = array<i64: 1, 32, 256>}]} {
    %c0 = arith.constant 0 : index
    %c0_0 = arith.constant 0 : index
    %0 = vector.load %arg3[%c0, %c0_0] : memref<32x64xbf16, #tpu.memory_space<vmem>>, vector<32x64xbf16>
    %c0_1 = arith.constant 0 : index
    %c0_2 = arith.constant 0 : index
    %c0_3 = arith.constant 0 : index
    %1 = vector.load %arg2[%c0_1, %c0_2, %c0_3] : memref<1x64x256xbf16, #tpu.memory_space<vmem>>, vector<1x64x256xbf16>
    %2 = vector.shape_cast %1 : vector<1x64x256xbf16> to vector<64x256xbf16>
    %cst = arith.constant dense<0.000000e+00> : vector<32x256xf32>
    %3 = tpu.matmul %0, %2, %cst {dimension_numbers = #tpu.dot_dimension_numbers<[1], [0], [0], [1], [0, 0, 1, 1], [], []>} : vector<32x64xbf16>, vector<64x256xbf16>, vector<32x256xf32> -> vector<32x256xf32>
    %c0_4 = arith.constant 0 : index
    %c0_5 = arith.constant 0 : index
    %4 = vector.load %arg4[%c0_4, %c0_5] : memref<32x1xf32, #tpu.memory_space<vmem>>, vector<32x1xf32>
    %5 = vector.broadcast %4 : vector<32x1xf32> to vector<32x256xf32>
    %6 = arith.addf %3, %5 : vector<32x256xf32>
    %c0_6 = arith.constant 0 : index
    %c0_7 = arith.constant 0 : index
    %c0_8 = arith.constant 0 : index
    %7 = vector.load %arg5[%c0_6, %c0_7, %c0_8] : memref<1x32x256xf32, #tpu.memory_space<vmem>>, vector<1x32x256xf32>
    %8 = vector.shape_cast %7 : vector<1x32x256xf32> to vector<32x256xf32>
    %9 = vector.shape_cast %6 : vector<32x256xf32> to vector<1x32x256xf32>
    tpu.vector_store %arg5[%c0_6, %c0_7, %c0_8], %9 {strides = array<i32>} : memref<1x32x256xf32, #tpu.memory_space<vmem>>, vector<1x32x256xf32>,
    return
  }
  func.func @transform_0(%arg0: i32, %arg1: i32) -> (i32, i32, i32) {
    %c0_i32 = arith.constant 0 : i32
    %c0_i32_0 = arith.constant 0 : i32
    return %arg0, %c0_i32, %arg1 : i32, i32, i32
  }
  func.func @transform_1(%arg0: i32, %arg1: i32) -> (i32, i32) {
    %c0_i32 = arith.constant 0 : i32
    %c0_i32_0 = arith.constant 0 : i32
    %c0_i32_1 = arith.constant 0 : i32
    return %c0_i32, %c0_i32_0 : i32, i32
  }
  func.func @transform_2(%arg0: i32, %arg1: i32) -> (i32, i32) {
    %c0_i32 = arith.constant 0 : i32
    %c0_i32_0 = arith.constant 0 : i32
    %c0_i32_1 = arith.constant 0 : i32
    return %c0_i32, %c0_i32_0 : i32, i32
  }
  func.func @transform_3(%arg0: i32, %arg1: i32) -> (i32, i32, i32) {
    %c0_i32 = arith.constant 0 : i32
    %c0_i32_0 = arith.constant 0 : i32
    return %arg0, %c0_i32, %arg1 : i32, i32, i32
  }
}

</mosaic_0001>

<llo_original>
// kernel: _lambda_.1
$region0: #{_lambda_.1}
  #allocation0 [shape = 'u32[]', space=smem, size = 0x4, offset = 0x4, fixed_abs, tag = 'smem constant byte address 0x4 - core index']
  #allocation1 [shape = 'u32[144,128]{1,0:T(1,128)}', space=vmem, size = 0x12000, scoped, tag = 'internal scratch']
  %s0 = inlined_call_operand.vmem [shape: bf16[2,64,256], index: 0, kind: input, shape index: {}]
  %s1 = inlined_call_operand.vmem [shape: bf16[32,64], index: 1, kind: input, shape index: {}]
  %s2 = inlined_call_operand.vmem [shape: f32[32,1], index: 2, kind: input, shape index: {}]
  %s3 = inlined_call_operand.hbm [shape: f32[2,32,256], index: 3, kind: output, shape index: {}]
  %s4 = sld [smem:[#allocation0]]
  $region45: #{_lambda_.1} parent=0
    _
  %s6 = ssub.s32 1, %s4
  %s7 = scalar_select 0, %s6, %s4
  $region1: #{_lambda_.1} parent=0
    #allocation2 [shape = 'u8[65536]{0}', space=vmem, size = 0x10000, scoped, tag = 'output window, operand 0']
    #allocation3 [shape = 's32[2]{0}', space=sflag, size = 0x8, scoped, tag = 'scoped memory for _lambda_.1']
    %8 = vsyncpa [#allocation3], 0
    %s9 = scalar_lea.sflag [#allocation3], 1
    %10 = vsyncpa %s9, 0
    loop: start=0, step=1, limit=4
    $region2: #{_lambda_.1} parent=1 // loop_pre_header
      _
    $region3: #{_lambda_.1} parent=1 // loop_header
      %s12 = sphi 0, %s16
      %p13 = scmp.ge.s32.totalorder %s12, 4
      %s19 = sphi 0, %s31
      %s20 = sphi 0, %s27
      %s21 = sphi 0, %s19
      %s22 = sphi 0, %s20
      %s23 = sphi 0, %s21
      %s24 = sphi 0, %s22
      %s36 = sphi 0, %s38
      %s39 = sphi 0, %s36
      %s40 = sphi 0, %s39
      %s56 = sphi 0, %s40
      %s60 = sphi 0, %s60
      %s62 = sphi 0, %s60
      %s63 = sphi 0, %s62
      %s77 = sphi 0, %s63
      %s81 = sphi 0, %s81
      %s83 = sphi 0, %s81
      %s84 = sphi 0, %s83
      %s98 = sphi 0, %s84
      %s106 = sphi 0, %s108
      %s109 = sphi 0, %s106
      %s110 = sphi 0, %s109
      %s126 = sphi 0, %s110
    $region4: #{_lambda_.1} parent=1 // loop_header_branch
      %15 = sbr.rel (%p13) target = $region8
    $region5: #{_lambda_.1} parent=1 // loop_body
      %s17 = ssub.s32 %s12, 1
      %s18 = ssub.s32 %s12, 2
      %s25 = sadd.s32 1, %s20
      %p26 = scmp.ge.s32.totalorder %s25, 1
      %s27 = scalar_select %p26, 0, %s25
      %s28 = sadd.s32 1, %s19
      %s29 = scalar_select %p26, %s28, %s19
      %p30 = scmp.ge.s32.totalorder %s29, 2
      %s31 = scalar_select %p30, 0, %s29
      %s32 = ssub.s32 %s19, %s31
      %s33 = ssub.s32 %s20, %s27
      %s34 = sor.u32 %s32, %s33
      %p35 = scmp.eq.s32.totalorder %s34, 0
      %s37 = sadd.s32 %s36, 1
      %s38 = scalar_select %p35, %s36, %s37
      %p41 = pneg %p35
      %p42 = scmp.eq.s32.totalorder %s12, 1
      %p43 = por %p41, %p42
      %p44 = scmp.ne.s32.totalorder %s36, %s39
      %p45 = scmp.eq.s32.totalorder %s12, 0
      %p46 = por %p44, %p45
      %p47 = scmp.ne.s32.totalorder %s36, %s39
      %p48 = scmp.eq.s32.totalorder %s17, 1
      %p49 = por %p47, %p48
      %p50 = scmp.ne.s32.totalorder %s39, %s40
      %p51 = scmp.eq.s32.totalorder %s17, 0
      %p52 = por %p50, %p51
      %p53 = scmp.ne.s32.totalorder %s39, %s40
      %p54 = scmp.eq.s32.totalorder %s18, 1
      %p55 = por %p53, %p54
      %p57 = scmp.ne.s32.totalorder %s40, %s56
      %p58 = scmp.eq.s32.totalorder %s18, 0
      %p59 = por %p57, %p58
      %s61 = sadd.s32 %s60, 1
      %p64 = scmp.eq.s32.totalorder %s12, 1
      %p65 = scmp.ne.s32.totalorder %s60, %s62
      %p66 = scmp.eq.s32.totalorder %s12, 0
      %p67 = por %p65, %p66
      %p68 = scmp.ne.s32.totalorder %s60, %s62
      %p69 = scmp.eq.s32.totalorder %s17, 1
      %p70 = por %p68, %p69
      %p71 = scmp.ne.s32.totalorder %s62, %s63
      %p72 = scmp.eq.s32.totalorder %s17, 0
      %p73 = por %p71, %p72
      %p74 = scmp.ne.s32.totalorder %s62, %s63
      %p75 = scmp.eq.s32.totalorder %s18, 1
      %p76 = por %p74, %p75
      %p78 = scmp.ne.s32.totalorder %s63, %s77
      %p79 = scmp.eq.s32.totalorder %s18, 0
      %p80 = por %p78, %p79
      %s82 = sadd.s32 %s81, 1
      %p85 = scmp.eq.s32.totalorder %s12, 1
      %p86 = scmp.ne.s32.totalorder %s81, %s83
      %p87 = scmp.eq.s32.totalorder %s12, 0
      %p88 = por %p86, %p87
      %p89 = scmp.ne.s32.totalorder %s81, %s83
      %p90 = scmp.eq.s32.totalorder %s17, 1
      %p91 = por %p89, %p90
      %p92 = scmp.ne.s32.totalorder %s83, %s84
      %p93 = scmp.eq.s32.totalorder %s17, 0
      %p94 = por %p92, %p93
      %p95 = scmp.ne.s32.totalorder %s83, %s84
      %p96 = scmp.eq.s32.totalorder %s18, 1
      %p97 = por %p95, %p96
      %p99 = scmp.ne.s32.totalorder %s84, %s98
      %p100 = scmp.eq.s32.totalorder %s18, 0
      %p101 = por %p99, %p100
      %s102 = ssub.s32 %s19, %s31
      %s103 = ssub.s32 %s20, %s27
      %s104 = sor.u32 %s102, %s103
      %p105 = scmp.eq.s32.totalorder %s104, 0
      %s107 = sadd.s32 %s106, 1
      %s108 = scalar_select %p105, %s106, %s107
      %p111 = pneg %p105
      %p112 = scmp.eq.s32.totalorder %s12, 1
      %p113 = por %p111, %p112
      %p114 = scmp.ne.s32.totalorder %s106, %s109
      %p115 = scmp.eq.s32.totalorder %s12, 0
      %p116 = por %p114, %p115
      %p117 = scmp.ne.s32.totalorder %s106, %s109
      %p118 = scmp.eq.s32.totalorder %s17, 1
      %p119 = por %p117, %p118
      %p120 = scmp.ne.s32.totalorder %s109, %s110
      %p121 = scmp.eq.s32.totalorder %s17, 0
      %p122 = por %p120, %p121
      %p123 = scmp.ne.s32.totalorder %s109, %s110
      %p124 = scmp.eq.s32.totalorder %s18, 1
      %p125 = por %p123, %p124
      %p127 = scmp.ne.s32.totalorder %s110, %s126
      %p128 = scmp.eq.s32.totalorder %s18, 0
      %p129 = por %p127, %p128
      %p130 = scmp.le.s32.totalorder 1, %s12
      %p131 = scmp.lt.s32.totalorder %s12, 3
      %p132 = pnand %p130, %p131
      %p133 = pneg %p132
      // Predicated region
      $region9: #{_lambda_.1} parent=5 // pred_check
        _
      $region10: #{_lambda_.1} parent=5 // pred_check_branch
        %135 = sbr.rel (%p132) target = $region12
      $region11: #{_lambda_.1} parent=5 // pred_region
        %s136 = ssub.s32 %s12, 1
        // Predicated region
        $region13: #{_lambda_.1} parent=11 // pred_check
          %p137 = pneg %p73
        $region14: #{_lambda_.1} parent=11 // pred_check_branch
          %139 = sbr.rel (%p137) target = $region16
        $region15: #{_lambda_.1} parent=11 // pred_region
          _
        $region16: #{_lambda_.1} parent=11 // pred_fallthru
          _
        // Predicated region
        $region17: #{_lambda_.1} parent=11 // pred_check
          %p140 = pneg %p94
        $region18: #{_lambda_.1} parent=11 // pred_check_branch
          %142 = sbr.rel (%p140) target = $region20
        $region19: #{_lambda_.1} parent=11 // pred_region
          _
        $region20: #{_lambda_.1} parent=11 // pred_fallthru
          _
      $region12: #{_lambda_.1} parent=5 // pred_fallthru
        _
      %p143 = scmp.lt.s32.totalorder %s12, 2
      // Predicated region
      $region21: #{_lambda_.1} parent=5 // pred_check
        %p144 = pneg %p143
      $region22: #{_lambda_.1} parent=5 // pred_check_branch
        %146 = sbr.rel (%p144) target = $region24
      $region23: #{_lambda_.1} parent=5 // pred_region
        // Predicated region
        $region25: #{_lambda_.1} parent=23 // pred_check
          %p147 = pneg %p46
        $region26: #{_lambda_.1} parent=23 // pred_check_branch
          %149 = sbr.rel (%p147) target = $region28
        $region27: #{_lambda_.1} parent=23 // pred_region
          %s150 = smul.u32 2, %s20
          %p151 = scmp.lt.s32.totalorder %s19, 1
          %s152 = scalar_select %p151, %s19, 1
          %p153 = scmp.lt.s32.totalorder %s150, 1
          %s154 = scalar_select %p153, %s150, 1
          %s155 = smul.addr %s152, 16
          %s156 = sadd.s32 %s154, %s155
          %s157 = smul.addr %s156, 4
          %s158 = scalar_lea.vmem %s0, %s157
          %s159 = smul.u32 2, %s20
        $region28: #{_lambda_.1} parent=23 // pred_fallthru
          _
      $region24: #{_lambda_.1} parent=5 // pred_fallthru
        _
      %p160 = scmp.le.s32.totalorder 1, %s12
      %p161 = scmp.lt.s32.totalorder %s12, 3
      %p162 = pnand %p160, %p161
      %p163 = pneg %p162
      // Predicated region
      $region29: #{_lambda_.1} parent=5 // pred_check
        _
      $region30: #{_lambda_.1} parent=5 // pred_check_branch
        %165 = sbr.rel (%p162) target = $region32
      $region31: #{_lambda_.1} parent=5 // pred_region
        %s166 = ssub.s32 %s12, 1
        %s167 = smul.u32 2, %s22
        %p168 = scmp.lt.s32.totalorder %s21, 1
        %s169 = scalar_select %p168, %s21, 1
        %p170 = scmp.lt.s32.totalorder %s167, 1
        %s171 = scalar_select %p170, %s167, 1
        %s172 = smul.addr %s169, 16
        %s173 = sadd.s32 %s171, %s172
        %s174 = smul.addr %s173, 4
        %s175 = scalar_lea.vmem %s0, %s174
        %p176 = pneg %p52
        %p177 = pneg %p49
        %p178 = pneg %p73
        %p179 = pneg %p70
        %p180 = pneg %p94
        %p181 = pneg %p91
        %p182 = pneg %p122
        %p183 = pneg %p119
        %s184 = sand.u32 %s109, 1
        %s185 = scalar_lea.sflag [#allocation3], %s184
        %s186 = sand.u32 %s109, 1
        %s187 = smul.addr %s186, 64
        %s188 = scalar_lea.vmem [#allocation2], %s187
        %s189 = smul.u32 2, %s22
        %p190 = scmp.lt.s32.totalorder %s21, 1
        %s191 = scalar_select %p190, %s21, 1
        %p192 = scmp.lt.s32.totalorder %s189, 1
        %s193 = scalar_select %p192, %s189, 1
        %s194 = smul.addr %s191, 16
        %s195 = sadd.s32 %s193, %s194
        %s196 = smul.addr %s195, 4
        %s197 = scalar_lea.vmem %s0, %s196
        %s198 = smul.u32 2, %s22
        %s199 = smul.u32 2, %s22
        %v201 = vld [vmem:[%s1] sm:$0xf]
        %v202 = vld [vmem:[%s1 + $0x4] sm:$0xf]
        %v203 = vld [vmem:[%s1 + $0x8] sm:$0xf]
        %v204 = vld [vmem:[%s1 + $0xc] sm:$0xf]
        %v205 = vld [vmem:[%s197] sm:$0xff]
        %v206 = vld [vmem:[%s197 + $0x8] sm:$0xff]
        %v207 = vld [vmem:[%s197 + $0x10] sm:$0xff]
        %v208 = vld [vmem:[%s197 + $0x18] sm:$0xff]
        %v209 = vld [vmem:[%s197 + $0x20] sm:$0xff]
        %v210 = vld [vmem:[%s197 + $0x28] sm:$0xff]
        %v211 = vld [vmem:[%s197 + $0x30] sm:$0xff]
        %v212 = vld [vmem:[%s197 + $0x38] sm:$0xff]
        %v213 = vld [vmem:[%s2] sm:$0xff]
        %v214 = vld [vmem:[%s2 + $0x8] sm:$0xff]
        %v215 = vld [vmem:[%s2 + $0x10] sm:$0xff]
        %v216 = vld [vmem:[%s2 + $0x18] sm:$0xff]
        %218 = vset.pattern.permute.xlu0 0
        %219 = vperm.xlu0 %218, %v213
        %v220 = vpop.permute.xlu0 %219
        %223 = vset.pattern.permute.xlu0 0
        %224 = vperm.xlu0 %223, %v214
        %v225 = vpop.permute.xlu0 %224
        %228 = vset.pattern.permute.xlu0 0
        %229 = vperm.xlu0 %228, %v215
        %v230 = vpop.permute.xlu0 %229
        %233 = vset.pattern.permute.xlu0 0
        %234 = vperm.xlu0 %233, %v216
        %v235 = vpop.permute.xlu0 %234
        %v241 = vunpack.c.l.b16 %v201
        %v242 = vunpack.c.l.b16 %v202
        %v243 = vunpack.c.l.b16 %v203
        %v244 = vunpack.c.l.b16 %v204
        %v245 = vpack.c.b16 %v242, %v241
        %v246 = vpack.c.b16 %v244, %v243
        %v255 = vunpack.c.l.b16 %v205
        %v256 = vunpack.c.h.b16 %v205
        %v257 = vunpack.c.l.b16 %v206
        %v258 = vunpack.c.h.b16 %v206
        %v259 = vunpack.c.l.b16 %v207
        %v260 = vunpack.c.h.b16 %v207
        %v261 = vunpack.c.l.b16 %v208
        %v262 = vunpack.c.h.b16 %v208
        %v263 = vunpack.c.l.b16 %v209
        %v264 = vunpack.c.h.b16 %v209
        %v265 = vunpack.c.l.b16 %v210
        %v266 = vunpack.c.h.b16 %v210
        %v267 = vunpack.c.l.b16 %v211
        %v268 = vunpack.c.h.b16 %v211
        %v269 = vunpack.c.l.b16 %v212
        %v270 = vunpack.c.h.b16 %v212
        %v271 = vpack.c.b16 %v257, %v255
        %v272 = vpack.c.b16 %v258, %v256
        %v273 = vpack.c.b16 %v261, %v259
        %v274 = vpack.c.b16 %v262, %v260
        %v275 = vpack.c.b16 %v265, %v263
        %v276 = vpack.c.b16 %v266, %v264
        %v277 = vpack.c.b16 %v269, %v267
        %v278 = vpack.c.b16 %v270, %v268
        %vm287 = vcmask 523264
        %v289 = vsel %vm287, %v245, 0
        %v292 = vsel %vm287, %v246, 0
        %294 = vmatprep.subr.bf16.mxu0 %v272
        %295 = vmatpush1.bf16.msra.mxu0 %v271
        %296 = vmatprep.subr.bf16.mxu0 %v274
        %297 = vmatpush1.bf16.msra.mxu0 %v273
        %298 = vmatprep.subr.bf16.mxu0 %v276
        %299 = vmatpush1.bf16.msra.mxu0 %v275
        %300 = vmatprep.subr.bf16.mxu0 %v278
        %301 = vmatpush1.bf16.msra.mxu0 %v277
        %302 = vmatprep.subr.bf16.mxu0 0
        %303 = vmatpush1.bf16.msra.mxu0 0
        %304 = vmatprep.subr.bf16.mxu0 0
        %305 = vmatpush1.bf16.msra.mxu0 0
        %306 = vmatprep.subr.bf16.mxu0 0
        %307 = vmatpush1.bf16.msra.mxu0 0
        %308 = vmatprep.subr.bf16.mxu0 0
        %309 = vmatpush1.bf16.msra.mxu0 0
        %310 = vmatprep.subr.bf16.mxu0 0
        %311 = vmatpush1.bf16.msra.mxu0 0
        %312 = vmatprep.subr.bf16.mxu0 0
        %313 = vmatpush1.bf16.msra.mxu0 0
        %314 = vmatprep.subr.bf16.mxu0 0
        %315 = vmatpush1.bf16.msra.mxu0 0
        %316 = vmatprep.subr.bf16.mxu0 0
        %317 = vmatpush1.bf16.msra.mxu0 0
        %318 = vmatprep.subr.bf16.mxu0 0
        %319 = vmatpush1.bf16.msra.mxu0 0
        %320 = vmatprep.subr.bf16.mxu0 0
        %321 = vmatpush1.bf16.msra.mxu0 0
        %322 = vmatprep.subr.bf16.mxu0 0
        %323 = vmatpush1.bf16.msra.mxu0 0
        %324 = vmatprep.subr.bf16.mxu0 0
        %325 = vmatpush1.bf16.msra.mxu0 0
        %326 = vmatprep.mubr.bf16.mxu0 0
        %327 = vmatmul.mubr.bf16.gmra.mrb[0].mxu0 %v289
        %v328 = vpop.f32.mrb[0].mxu0
        %v329 = vadd.f32 %v220, %v328
        %v330 = vpop.f32.mrb[0].mxu0
        %v331 = vadd.f32 %v220, %v330
        %v332 = vpop.f32.mrb[0].mxu0
        %v333 = vadd.f32 %v225, %v332
        %v334 = vpop.f32.mrb[0].mxu0
        %v335 = vadd.f32 %v225, %v334
        %336 = vmatprep.mubr.bf16.mxu0 0
        %337 = vmatmul.mubr.bf16.gmra.mrb[0].mxu0 %v292
        %v338 = vpop.f32.mrb[0].mxu0
        %v339 = vadd.f32 %v230, %v338
        %v340 = vpop.f32.mrb[0].mxu0
        %v341 = vadd.f32 %v230, %v340
        %v342 = vpop.f32.mrb[0].mxu0
        %v343 = vadd.f32 %v235, %v342
        %v344 = vpop.f32.mrb[0].mxu0
        %v345 = vadd.f32 %v235, %v344
        %346 = vdwg.mxu0
        %347 = vst [vmem:[%s188] sm:$0xff] %v329
        %348 = vst [vmem:[%s188 + $0x8] sm:$0xff] %v331
        %349 = vst [vmem:[%s188 + $0x10] sm:$0xff] %v333
        %350 = vst [vmem:[%s188 + $0x18] sm:$0xff] %v335
        %351 = vst [vmem:[%s188 + $0x20] sm:$0xff] %v339
        %352 = vst [vmem:[%s188 + $0x28] sm:$0xff] %v341
        %353 = vst [vmem:[%s188 + $0x30] sm:$0xff] %v343
        %354 = vst [vmem:[%s188 + $0x38] sm:$0xff] %v345
        %s355 = sand.u32 %s109, 1
        %s356 = scalar_lea.sflag [#allocation3], %s355
        %s357 = sand.u32 %s109, 1
        %s358 = smul.addr %s357, 64
        %s359 = scalar_lea.vmem [#allocation2], %s358
        // Predicated region
        $region33: #{_lambda_.1} parent=31 // pred_check
          %p360 = pneg %p119
        $region34: #{_lambda_.1} parent=31 // pred_check_branch
          %362 = sbr.rel (%p360) target = $region36
        $region35: #{_lambda_.1} parent=31 // pred_region
          %s363 = smul.u32 2, %s22
          %s365 = ssub.s32 1024, 1024
          %366 = vsyncadd %s356, %s365
          %s367 = smul.addr %s21, 8
          %s368 = sadd.s32 %s363, %s367
          %s369 = smul.addr %s368, 128
          %s370 = scalar_lea.hbm %s3, %s369
          %s371 = sshll.u32 %s359, 4
          %s372 = int_to_ptr.vmem [resolvable:$true] %s371
          %377 = dma.vmem_to_hbm [thread:$0]  %s372, 1024, %s370, %s356, 256, 256, 16
        $region36: #{_lambda_.1} parent=31 // pred_fallthru
          _
      $region32: #{_lambda_.1} parent=5 // pred_fallthru
        _
      %p378 = scmp.le.s32.totalorder 2, %s12
      // Predicated region
      $region37: #{_lambda_.1} parent=5 // pred_check
        %p379 = pneg %p378
      $region38: #{_lambda_.1} parent=5 // pred_check_branch
        %381 = sbr.rel (%p379) target = $region40
      $region39: #{_lambda_.1} parent=5 // pred_region
        %s382 = ssub.s32 %s12, 2
        // Predicated region
        $region41: #{_lambda_.1} parent=39 // pred_check
          %p383 = pneg %p125
        $region42: #{_lambda_.1} parent=39 // pred_check_branch
          %385 = sbr.rel (%p383) target = $region44
        $region43: #{_lambda_.1} parent=39 // pred_region
          %s386 = sand.u32 %s110, 1
          %s387 = scalar_lea.sflag [#allocation3], %s386
          %s388 = sand.u32 %s110, 1
          %s389 = smul.addr %s388, 64
          %s390 = scalar_lea.vmem [#allocation2], %s389
          %391 = dma.done %s387, 1024
        $region44: #{_lambda_.1} parent=39 // pred_fallthru
          _
      $region40: #{_lambda_.1} parent=5 // pred_fallthru
        _
    $region6: #{_lambda_.1} parent=1 // loop_footer
      %s16 = sadd.s32 1, %s12
    $region7: #{_lambda_.1} parent=1 // loop_footer_branch
      %11 = sbr.rel target = $region3
    $region8: #{_lambda_.1} parent=1 // loop_exit
      _
    %392 = vsyncpa [#allocation3], 1
    %s393 = scalar_lea.sflag [#allocation3], 1
    %394 = vsyncpa %s393, 1

</llo_original>
